<compile_context>
chip_gen: v7x
topology: tpu7x:2x2x1
jax: 0.10.0
libtpu: 0.0.40
codegen_flags: <defaults>
</compile_context>

<pallas_src>
import jax
import jax.numpy as jnp
from jax.experimental import pallas as pl
from jax.experimental.pallas import tpu as pltpu


def _fused_mlp_kernel(x_ref, *refs):
    """refs = (w0, b0, w1, b1, ..., w_{D-1}, b_{D-1}, o_ref).

    Feature-major: x_ref is (n_in, tm) with batch on the lane axis.  The layer
    loop is unrolled in Python; intermediate activations stay in vregs (never
    touch HBM).  Only the final (n_out, tm) tile is stored — dense lanes.
    """
    o_ref = refs[-1]
    wb = refs[:-1]
    depth = len(wb) // 2

    h = x_ref[...]                                      # (n_in, tm), bf16
    for i in range(depth):
        w = wb[2 * i][...]                              # (out, in), bf16 (MXU)
        b = wb[2 * i + 1][...]                          # (out, 1),  f32
        y = jnp.dot(w, h.astype(w.dtype),
                    preferred_element_type=jnp.float32) + b
        # sigmoid(y) == 0.5 * tanh(0.5 * y) + 0.5  (exact; EUP tanh, f32 math)
        h = 0.5 * jnp.tanh(0.5 * y) + 0.5               # f32 (out, tm)
    o_ref[...] = h.astype(o_ref.dtype)


def _batch_tile(M, block_m):
    """Lane-dense batch tile: multiple of 128 when the batch allows it, capped
    so the parallel grid has >=2 steps (keeps v7x's second TensorCore busy)."""
    block_m = max(128, (block_m // 128) * 128)
    if M <= 128:
        return M                      # tiny batch: single full block
    half = (M // 2) // 128 * 128
    if half < 128:
        return 128
    return min(block_m, half)


def fused_mlp_forward(xt, params, *, block_m=512):
    """sigmoid(...W1 @ sigmoid(W0 @ xt + b0) + b1...) in one pallas_call.

    xt:     (n_in, M)  feature-major input (batch on lanes)
    params: list of (w, b); w: (out, in)  [PyTorch orientation], b: (out, 1)
    returns (n_out, M) float32
    """
    n_in, M = xt.shape
    n_out = params[-1][0].shape[0]

    tm = _batch_tile(M, block_m)
    grid = (pl.cdiv(M, tm),)          # trailing partial tile handled by Pallas

    flat_wb = []
    in_specs = [pl.BlockSpec((n_in, tm), lambda i: (0, i))]
    for w, b in params:
        flat_wb.append(w)
        flat_wb.append(b)
        # Constant index_map: weights/biases stay VMEM-resident for the whole
        # call. (For huge hidden widths on v7x, single-buffer these with
        # pipeline_mode=pl.Buffered(1) to halve their VMEM footprint.)
        in_specs.append(pl.BlockSpec(w.shape, lambda i: (0, 0)))
        in_specs.append(pl.BlockSpec(b.shape, lambda i: (0, 0)))

    # Advisory cost estimate + scoped-VMEM sizing from the real footprint.
    wb_bytes = sum(a.size * a.dtype.itemsize for a in flat_wb)
    flops = 2 * M * sum(w.shape[0] * w.shape[1] for w, _ in params)
    transcendentals = M * sum(w.shape[0] for w, _ in params)
    bytes_accessed = xt.size * xt.dtype.itemsize + n_out * M * 4 + wb_bytes
    tile_bytes = n_in * tm * xt.dtype.itemsize + n_out * tm * 4
    vmem_limit = int(min(max(4 * (tile_bytes + wb_bytes) + (1 << 20),
                             16 * 1024 * 1024),
                         64 * 1024 * 1024))

    return pl.pallas_call(
        _fused_mlp_kernel,
        out_shape=jax.ShapeDtypeStruct((n_out, M), jnp.float32),
        grid=grid,
        in_specs=in_specs,
        out_specs=pl.BlockSpec((n_out, tm), lambda i: (0, i)),
        compiler_params=pltpu.CompilerParams(
            dimension_semantics=("parallel",),
            vmem_limit_bytes=vmem_limit),
        cost_estimate=pl.CostEstimate(
            flops=flops,
            transcendentals=transcendentals,
            bytes_accessed=bytes_accessed),
    )(xt, *flat_wb)


def init_net_params(key, layers_size, depth, n_in, n_out, *, dtype=jnp.bfloat16):
    """Deterministic init matching the nn.Linear shapes of Net.__init__.

    Layer 0:            (n_in -> layers_size)
    Layers 1..depth-2:  (layers_size -> layers_size)
    Layer depth-1:      (layers_size -> n_out)

    Weights kept in PyTorch's (out_features, in_features) orientation, stored
    bf16 for the MXU; biases stored f32 as (out, 1) columns so they
    lane-broadcast over the batch inside the kernel.
    """
    dims = [n_in] + [layers_size] * (depth - 1) + [n_out]
    params = []
    for i in range(depth):
        fan_in, fan_out = dims[i], dims[i + 1]
        key, kw, kb = jax.random.split(key, 3)
        bound = float(fan_in) ** -0.5
        w = jax.random.uniform(kw, (fan_out, fan_in), jnp.float32, -bound, bound)
        b = jax.random.uniform(kb, (fan_out, 1), jnp.float32, -bound, bound)
        params.append((w.astype(dtype), b))
    return params


@jax.jit
def net_forward(x, params):
    # Entire `for f in self.layers: x = torch.sigmoid(f(x))` in one kernel.
    # Boundary transposes are layout plumbing only (batch onto the lane axis).
    xt = x.T.astype(params[0][0].dtype)        # (n_in, M), bf16
    out_t = fused_mlp_forward(xt, params)      # (n_out, M), f32
    return out_t.T                             # (M, n_out)


def net_forward_ref(x, params):
    # Pure-JAX f32 reference (same weights, batch-major orientation).
    h = x.astype(jnp.float32)
    for w, b in params:
        h = jax.nn.sigmoid(h @ w.astype(jnp.float32).T + b.astype(jnp.float32).T)
    return h


if __name__ == "__main__":
    # Small shapes consistent with Net(layers_size=32, depth=3, n_in=16, n_out=8)
    batch, n_in, layers_size, depth, n_out = 8, 16, 32, 3, 8

    key = jax.random.PRNGKey(0)
    key, kx = jax.random.split(key)
    x = jax.random.normal(kx, (batch, n_in), jnp.float32)
    params = init_net_params(key, layers_size, depth, n_in, n_out)

    out = jax.block_until_ready(net_forward(x, params))
    ref = net_forward_ref(x, params)
    assert out.shape == (batch, n_out)
    # bf16 MXU inputs -> loosened tolerance vs the f32 reference.
    assert jnp.allclose(out, ref, atol=2e-2, rtol=2e-2)

    # Larger batch: exercises the multi-step parallel grid and the trailing
    # partial batch tile (no wrapper-side pad / slice).
    x2 = jax.random.normal(jax.random.PRNGKey(1), (300, n_in), jnp.float32)
    out2 = jax.block_until_ready(net_forward(x2, params))
    ref2 = net_forward_ref(x2, params)
    assert out2.shape == (300, n_out)
    assert jnp.allclose(out2, ref2, atol=2e-2, rtol=2e-2)

    print("KERNEL_OK")
</pallas_src>

<mosaic_0001>
module attributes {stable_mosaic.version = 11 : i64} {
  func.func @_fused_mlp_kernel(%arg0: i32, %arg1: memref<16x8xbf16, #tpu.memory_space<vmem>>, %arg2: memref<32x16xbf16, #tpu.memory_space<vmem>>, %arg3: memref<32x1xf32, #tpu.memory_space<vmem>>, %arg4: memref<32x32xbf16, #tpu.memory_space<vmem>>, %arg5: memref<32x1xf32, #tpu.memory_space<vmem>>, %arg6: memref<8x32xbf16, #tpu.memory_space<vmem>>, %arg7: memref<8x1xf32, #tpu.memory_space<vmem>>, %arg8: memref<8x8xf32, #tpu.memory_space<vmem>>) attributes {dimension_semantics = [#tpu.dimension_semantics<parallel>], iteration_bounds = array<i64: 1>, scalar_prefetch = 0 : i64, scratch_operands = 0 : i64, tpu.core_type = #tpu.core_type<tc>, window_params = [{transform_indices = @transform_0, window_bounds = array<i64: 16, 8>}, {pipeline_mode = #tpu.pipeline_mode<synchronous>, transform_indices = @transform_1, window_bounds = array<i64: 32, 16>}, {pipeline_mode = #tpu.pipeline_mode<synchronous>, transform_indices = @transform_2, window_bounds = array<i64: 32, 1>}, {pipeline_mode = #tpu.pipeline_mode<synchronous>, transform_indices = @transform_3, window_bounds = array<i64: 32, 32>}, {pipeline_mode = #tpu.pipeline_mode<synchronous>, transform_indices = @transform_4, window_bounds = array<i64: 32, 1>}, {pipeline_mode = #tpu.pipeline_mode<synchronous>, transform_indices = @transform_5, window_bounds = array<i64: 8, 32>}, {pipeline_mode = #tpu.pipeline_mode<synchronous>, transform_indices = @transform_6, window_bounds = array<i64: 8, 1>}, {transform_indices = @transform_7, window_bounds = array<i64: 8, 8>}]} {
    %c0 = arith.constant 0 : index
    %c0_0 = arith.constant 0 : index
    %0 = vector.load %arg1[%c0, %c0_0] : memref<16x8xbf16, #tpu.memory_space<vmem>>, vector<16x8xbf16>
    %c0_1 = arith.constant 0 : index
    %c0_2 = arith.constant 0 : index
    %1 = vector.load %arg2[%c0_1, %c0_2] : memref<32x16xbf16, #tpu.memory_space<vmem>>, vector<32x16xbf16>
    %c0_3 = arith.constant 0 : index
    %c0_4 = arith.constant 0 : index
    %2 = vector.load %arg3[%c0_3, %c0_4] : memref<32x1xf32, #tpu.memory_space<vmem>>, vector<32x1xf32>
    %cst = arith.constant dense<0.000000e+00> : vector<32x8xf32>
    %3 = tpu.matmul %1, %0, %cst {dimension_numbers = #tpu.dot_dimension_numbers<[1], [0], [0], [1], [0, 0, 1, 1], [], []>} : vector<32x16xbf16>, vector<16x8xbf16>, vector<32x8xf32> -> vector<32x8xf32>
    %4 = vector.broadcast %2 : vector<32x1xf32> to vector<32x8xf32>
    %5 = arith.addf %3, %4 : vector<32x8xf32>
    %cst_5 = arith.constant 5.000000e-01 : f32
    %6 = vector.broadcast %cst_5 : f32 to vector<32x8xf32>
    %7 = arith.mulf %6, %5 : vector<32x8xf32>
    %8 = math.tanh %7 : vector<32x8xf32>
    %cst_6 = arith.constant 5.000000e-01 : f32
    %9 = vector.broadcast %cst_6 : f32 to vector<32x8xf32>
    %10 = arith.mulf %9, %8 : vector<32x8xf32>
    %cst_7 = arith.constant 5.000000e-01 : f32
    %11 = vector.broadcast %cst_7 : f32 to vector<32x8xf32>
    %12 = arith.addf %10, %11 : vector<32x8xf32>
    %c0_8 = arith.constant 0 : index
    %c0_9 = arith.constant 0 : index
    %13 = vector.load %arg4[%c0_8, %c0_9] : memref<32x32xbf16, #tpu.memory_space<vmem>>, vector<32x32xbf16>
    %c0_10 = arith.constant 0 : index
    %c0_11 = arith.constant 0 : index
    %14 = vector.load %arg5[%c0_10, %c0_11] : memref<32x1xf32, #tpu.memory_space<vmem>>, vector<32x1xf32>
    %15 = arith.truncf %12 : vector<32x8xf32> to vector<32x8xbf16>
    %cst_12 = arith.constant dense<0.000000e+00> : vector<32x8xf32>
    %16 = tpu.matmul %13, %15, %cst_12 {dimension_numbers = #tpu.dot_dimension_numbers<[1], [0], [0], [1], [0, 0, 1, 1], [], []>} : vector<32x32xbf16>, vector<32x8xbf16>, vector<32x8xf32> -> vector<32x8xf32>
    %17 = vector.broadcast %14 : vector<32x1xf32> to vector<32x8xf32>
    %18 = arith.addf %16, %17 : vector<32x8xf32>
    %cst_13 = arith.constant 5.000000e-01 : f32
    %19 = vector.broadcast %cst_13 : f32 to vector<32x8xf32>
    %20 = arith.mulf %19, %18 : vector<32x8xf32>
    %21 = math.tanh %20 : vector<32x8xf32>
    %cst_14 = arith.constant 5.000000e-01 : f32
    %22 = vector.broadcast %cst_14 : f32 to vector<32x8xf32>
    %23 = arith.mulf %22, %21 : vector<32x8xf32>
    %cst_15 = arith.constant 5.000000e-01 : f32
    %24 = vector.broadcast %cst_15 : f32 to vector<32x8xf32>
    %25 = arith.addf %23, %24 : vector<32x8xf32>
    %c0_16 = arith.constant 0 : index
    %c0_17 = arith.constant 0 : index
    %26 = vector.load %arg6[%c0_16, %c0_17] : memref<8x32xbf16, #tpu.memory_space<vmem>>, vector<8x32xbf16>
    %c0_18 = arith.constant 0 : index
    %c0_19 = arith.constant 0 : index
    %27 = vector.load %arg7[%c0_18, %c0_19] : memref<8x1xf32, #tpu.memory_space<vmem>>, vector<8x1xf32>
    %28 = arith.truncf %25 : vector<32x8xf32> to vector<32x8xbf16>
    %cst_20 = arith.constant dense<0.000000e+00> : vector<8x8xf32>
    %29 = tpu.matmul %26, %28, %cst_20 {dimension_numbers = #tpu.dot_dimension_numbers<[1], [0], [0], [1], [0, 0, 1, 1], [], []>} : vector<8x32xbf16>, vector<32x8xbf16>, vector<8x8xf32> -> vector<8x8xf32>
    %30 = vector.broadcast %27 : vector<8x1xf32> to vector<8x8xf32>
    %31 = arith.addf %29, %30 : vector<8x8xf32>
    %cst_21 = arith.constant 5.000000e-01 : f32
    %32 = vector.broadcast %cst_21 : f32 to vector<8x8xf32>
    %33 = arith.mulf %32, %31 : vector<8x8xf32>
    %34 = math.tanh %33 : vector<8x8xf32>
    %cst_22 = arith.constant 5.000000e-01 : f32
    %35 = vector.broadcast %cst_22 : f32 to vector<8x8xf32>
    %36 = arith.mulf %35, %34 : vector<8x8xf32>
    %cst_23 = arith.constant 5.000000e-01 : f32
    %37 = vector.broadcast %cst_23 : f32 to vector<8x8xf32>
    %38 = arith.addf %36, %37 : vector<8x8xf32>
    %c0_24 = arith.constant 0 : index
    %c0_25 = arith.constant 0 : index
    %39 = vector.load %arg8[%c0_24, %c0_25] : memref<8x8xf32, #tpu.memory_space<vmem>>, vector<8x8xf32>
    tpu.vector_store %arg8[%c0_24, %c0_25], %38 {strides = array<i32>} : memref<8x8xf32, #tpu.memory_space<vmem>>, vector<8x8xf32>,
    return
  }
  func.func @transform_0(%arg0: i32) -> (i32, i32) {
    %c0_i32 = arith.constant 0 : i32
    %c0_i32_0 = arith.constant 0 : i32
    return %c0_i32, %arg0 : i32, i32
  }
  func.func @transform_1(%arg0: i32) -> (i32, i32) {
    %c0_i32 = arith.constant 0 : i32
    %c0_i32_0 = arith.constant 0 : i32
    %c0_i32_1 = arith.constant 0 : i32
    return %c0_i32, %c0_i32_0 : i32, i32
  }
  func.func @transform_2(%arg0: i32) -> (i32, i32) {
    %c0_i32 = arith.constant 0 : i32
    %c0_i32_0 = arith.constant 0 : i32
    %c0_i32_1 = arith.constant 0 : i32
    return %c0_i32, %c0_i32_0 : i32, i32
  }
  func.func @transform_3(%arg0: i32) -> (i32, i32) {
    %c0_i32 = arith.constant 0 : i32
    %c0_i32_0 = arith.constant 0 : i32
    %c0_i32_1 = arith.constant 0 : i32
    return %c0_i32, %c0_i32_0 : i32, i32
  }
  func.func @transform_4(%arg0: i32) -> (i32, i32) {
    %c0_i32 = arith.constant 0 : i32
    %c0_i32_0 = arith.constant 0 : i32
    %c0_i32_1 = arith.constant 0 : i32
    return %c0_i32, %c0_i32_0 : i32, i32
  }
  func.func @transform_5(%arg0: i32) -> (i32, i32) {
    %c0_i32 = arith.constant 0 : i32
    %c0_i32_0 = arith.constant 0 : i32
    %c0_i32_1 = arith.constant 0 : i32
    return %c0_i32, %c0_i32_0 : i32, i32
  }
  func.func @transform_6(%arg0: i32) -> (i32, i32) {
    %c0_i32 = arith.constant 0 : i32
    %c0_i32_0 = arith.constant 0 : i32
    %c0_i32_1 = arith.constant 0 : i32
    return %c0_i32, %c0_i32_0 : i32, i32
  }
  func.func @transform_7(%arg0: i32) -> (i32, i32) {
    %c0_i32 = arith.constant 0 : i32
    %c0_i32_0 = arith.constant 0 : i32
    return %c0_i32, %arg0 : i32, i32
  }
}

</mosaic_0001>

<llo_original>
// kernel: net_forward.1
$region0: #{net_forward.1}
  #allocation0 [shape = 'u32[]', space=smem, size = 0x4, offset = 0x4, fixed_abs, tag = 'smem constant byte address 0x4 - core index']
  #allocation1 [shape = 'u32[144,128]{1,0:T(1,128)}', space=vmem, size = 0x12000, scoped, tag = 'internal scratch']
  %s0 = inlined_call_operand.vmem [shape: bf16[16,8], index: 0, kind: input, shape index: {}]
  %s1 = inlined_call_operand.vmem [shape: bf16[32,16], index: 1, kind: input, shape index: {}]
  %s2 = inlined_call_operand.vmem [shape: f32[32,1], index: 2, kind: input, shape index: {}]
  %s3 = inlined_call_operand.vmem [shape: bf16[32,32], index: 3, kind: input, shape index: {}]
  %s4 = inlined_call_operand.vmem [shape: f32[32,1], index: 4, kind: input, shape index: {}]
  %s5 = inlined_call_operand.vmem [shape: bf16[8,32], index: 5, kind: input, shape index: {}]
  %s6 = inlined_call_operand.vmem [shape: f32[8,1], index: 6, kind: input, shape index: {}]
  %s7 = inlined_call_operand.vmem [shape: f32[8,8], index: 7, kind: output, shape index: {}]
  %s8 = sld [smem:[#allocation0]]
  $region38: #{net_forward.1} parent=0
    _
  %s10 = ssub.s32 1, %s8
  %s11 = scalar_select 0, %s10, %s8
  // Predicated region
  $region2: #{net_forward.1} parent=0 // pred_check
    _
  $region3: #{net_forward.1} parent=0 // pred_check_branch
    %13 = sbr.rel (0) target = $region5
  $region4: #{net_forward.1} parent=0 // pred_region
    _
  $region5: #{net_forward.1} parent=0 // pred_fallthru
    _
  // Predicated region
  $region6: #{net_forward.1} parent=0 // pred_check
    _
  $region7: #{net_forward.1} parent=0 // pred_check_branch
    %15 = sbr.rel (0) target = $region9
  $region8: #{net_forward.1} parent=0 // pred_region
    _
  $region9: #{net_forward.1} parent=0 // pred_fallthru
    _
  // Predicated region
  $region10: #{net_forward.1} parent=0 // pred_check
    _
  $region11: #{net_forward.1} parent=0 // pred_check_branch
    %17 = sbr.rel (0) target = $region13
  $region12: #{net_forward.1} parent=0 // pred_region
    _
  $region13: #{net_forward.1} parent=0 // pred_fallthru
    _
  // Predicated region
  $region14: #{net_forward.1} parent=0 // pred_check
    _
  $region15: #{net_forward.1} parent=0 // pred_check_branch
    %19 = sbr.rel (0) target = $region17
  $region16: #{net_forward.1} parent=0 // pred_region
    _
  $region17: #{net_forward.1} parent=0 // pred_fallthru
    _
  // Predicated region
  $region18: #{net_forward.1} parent=0 // pred_check
    _
  $region19: #{net_forward.1} parent=0 // pred_check_branch
    %21 = sbr.rel (0) target = $region21
  $region20: #{net_forward.1} parent=0 // pred_region
    _
  $region21: #{net_forward.1} parent=0 // pred_fallthru
    _
  // Predicated region
  $region22: #{net_forward.1} parent=0 // pred_check
    _
  $region23: #{net_forward.1} parent=0 // pred_check_branch
    %23 = sbr.rel (0) target = $region25
  $region24: #{net_forward.1} parent=0 // pred_region
    _
  $region25: #{net_forward.1} parent=0 // pred_fallthru
    _
  // Predicated region
  $region26: #{net_forward.1} parent=0 // pred_check
    _
  $region27: #{net_forward.1} parent=0 // pred_check_branch
    %25 = sbr.rel (0) target = $region29
  $region28: #{net_forward.1} parent=0 // pred_region
    _
  $region29: #{net_forward.1} parent=0 // pred_fallthru
    _
  %v27 = vld [vmem:[%s0] sm:$0xf]
  %v28 = vld [vmem:[%s0 + $0x4] sm:$0xf]
  %v29 = vld [vmem:[%s1] sm:$0xf]
  %v30 = vld [vmem:[%s1 + $0x4] sm:$0xf]
  %v31 = vld [vmem:[%s1 + $0x8] sm:$0xf]
  %v32 = vld [vmem:[%s1 + $0xc] sm:$0xf]
  %v33 = vld [vmem:[%s2] sm:$0xff]
  %v34 = vld [vmem:[%s2 + $0x8] sm:$0xff]
  %v35 = vld [vmem:[%s2 + $0x10] sm:$0xff]
  %v36 = vld [vmem:[%s2 + $0x18] sm:$0xff]
  %38 = vset.pattern.permute.xlu0 0
  %39 = vperm.xlu0 %38, %v33
  %v40 = vpop.permute.xlu0 %39
  %43 = vset.pattern.permute.xlu0 0
  %44 = vperm.xlu0 %43, %v34
  %v45 = vpop.permute.xlu0 %44
  %48 = vset.pattern.permute.xlu0 0
  %49 = vperm.xlu0 %48, %v35
  %v50 = vpop.permute.xlu0 %49
  %53 = vset.pattern.permute.xlu0 0
  %54 = vperm.xlu0 %53, %v36
  %v55 = vpop.permute.xlu0 %54
  %v61 = vunpack.c.l.b16 %v29
  %v62 = vunpack.c.l.b16 %v30
  %v63 = vunpack.c.l.b16 %v31
  %v64 = vunpack.c.l.b16 %v32
  %v65 = vpack.c.b16 %v62, %v61
  %v66 = vpack.c.b16 %v64, %v63
  %v69 = vunpack.c.l.b16 %v27
  %v70 = vunpack.c.l.b16 %v28
  %v71 = vpack.c.b16 %v70, %v69
  %vm73 = vcmask 130048
  %v75 = vsel %vm73, %v65, 0
  %v78 = vsel %vm73, %v66, 0
  %80 = vmatprep.subr.bf16.mxu0 0
  %81 = vmatpush1.bf16.msra.mxu0 %v71
  %82 = vmatprep.subr.bf16.mxu0 0
  %83 = vmatpush1.bf16.msra.mxu0 0
  %84 = vmatprep.subr.bf16.mxu0 0
  %85 = vmatpush1.bf16.msra.mxu0 0
  %86 = vmatprep.subr.bf16.mxu0 0
  %87 = vmatpush1.bf16.msra.mxu0 0
  %88 = vmatprep.subr.bf16.mxu0 0
  %89 = vmatpush1.bf16.msra.mxu0 0
  %90 = vmatprep.subr.bf16.mxu0 0
  %91 = vmatpush1.bf16.msra.mxu0 0
  %92 = vmatprep.subr.bf16.mxu0 0
  %93 = vmatpush1.bf16.msra.mxu0 0
  %94 = vmatprep.subr.bf16.mxu0 0
  %95 = vmatpush1.bf16.msra.mxu0 0
  %96 = vmatprep.subr.bf16.mxu0 0
  %97 = vmatpush1.bf16.msra.mxu0 0
  %98 = vmatprep.subr.bf16.mxu0 0
  %99 = vmatpush1.bf16.msra.mxu0 0
  %100 = vmatprep.subr.bf16.mxu0 0
  %101 = vmatpush1.bf16.msra.mxu0 0
  %102 = vmatprep.subr.bf16.mxu0 0
  %103 = vmatpush1.bf16.msra.mxu0 0
  %104 = vmatprep.subr.bf16.mxu0 0
  %105 = vmatpush1.bf16.msra.mxu0 0
  %106 = vmatprep.subr.bf16.mxu0 0
  %107 = vmatpush1.bf16.msra.mxu0 0
  %108 = vmatprep.subr.bf16.mxu0 0
  %109 = vmatpush1.bf16.msra.mxu0 0
  %110 = vmatprep.subr.bf16.mxu0 0
  %111 = vmatpush1.bf16.msra.mxu0 0
  %112 = vmatprep.mubr.bf16.mxu0 0
  %113 = vmatmul.mubr.bf16.gmra.mrb[0].mxu0 %v75
  %v114 = vpop.f32.mrb[0].mxu0
  %v115 = vadd.f32 %v40, %v114
  %v116 = vpop.f32.mrb[0].mxu0
  %v117 = vpop.f32.mrb[0].mxu0
  %v118 = vadd.f32 %v45, %v117
  %v119 = vpop.f32.mrb[0].mxu0
  %120 = vmatprep.mubr.bf16.mxu0 0
  %121 = vmatmul.mubr.bf16.gmra.mrb[0].mxu0 %v78
  %v122 = vpop.f32.mrb[0].mxu0
  %v123 = vadd.f32 %v50, %v122
  %v124 = vpop.f32.mrb[0].mxu0
  %v125 = vpop.f32.mrb[0].mxu0
  %v126 = vadd.f32 %v55, %v125
  %v127 = vpop.f32.mrb[0].mxu0
  %128 = vdwg.mxu0
  %v129 = vmul.f32 %v115, 0.5
  %v130 = vmul.f32 %v118, 0.5
  %v131 = vmul.f32 %v123, 0.5
  %v132 = vmul.f32 %v126, 0.5
  %v133 = vtanh.pop %v129
  %v134 = vtanh.pop %v130
  %v135 = vtanh.pop %v131
  %v136 = vtanh.pop %v132
  %v137 = vmul.f32 %v133, 0.5
  %v138 = vmul.f32 %v134, 0.5
  %v139 = vmul.f32 %v135, 0.5
  %v140 = vmul.f32 %v136, 0.5
  %v141 = vadd.f32 %v137, 0.5
  %v142 = vadd.f32 %v138, 0.5
  %v143 = vadd.f32 %v139, 0.5
  %v144 = vadd.f32 %v140, 0.5
  %v145 = vld [vmem:[%s3] sm:$0xf]
  %v146 = vld [vmem:[%s3 + $0x4] sm:$0xf]
  %v147 = vld [vmem:[%s3 + $0x8] sm:$0xf]
  %v148 = vld [vmem:[%s3 + $0xc] sm:$0xf]
  %v149 = vld [vmem:[%s4] sm:$0xff]
  %v150 = vld [vmem:[%s4 + $0x8] sm:$0xff]
  %v151 = vld [vmem:[%s4 + $0x10] sm:$0xff]
  %v152 = vld [vmem:[%s4 + $0x18] sm:$0xff]
  %v153 = vpack.c.bf16 %v142, %v141
  %v154 = vpack.c.bf16 %v144, %v143
  %156 = vset.pattern.permute.xlu0 0
  %157 = vperm.xlu0 %156, %v149
  %v158 = vpop.permute.xlu0 %157
  %161 = vset.pattern.permute.xlu0 0
  %162 = vperm.xlu0 %161, %v150
  %v163 = vpop.permute.xlu0 %162
  %166 = vset.pattern.permute.xlu0 0
  %167 = vperm.xlu0 %166, %v151
  %v168 = vpop.permute.xlu0 %167
  %171 = vset.pattern.permute.xlu0 0
  %172 = vperm.xlu0 %171, %v152
  %v173 = vpop.permute.xlu0 %172
  %v179 = vunpack.c.l.b16 %v145
  %v180 = vunpack.c.l.b16 %v146
  %v181 = vunpack.c.l.b16 %v147
  %v182 = vunpack.c.l.b16 %v148
  %v183 = vpack.c.b16 %v180, %v179
  %v184 = vpack.c.b16 %v182, %v181
  %vm185 = vcmask 261120
  %v187 = vsel %vm185, %v183, 0
  %v190 = vsel %vm185, %v184, 0
  %192 = vmatprep.subr.bf16.mxu0 0
  %193 = vmatpush1.bf16.msra.mxu0 %v153
  %194 = vmatprep.subr.bf16.mxu0 0
  %195 = vmatpush1.bf16.msra.mxu0 %v154
  %196 = vmatprep.subr.bf16.mxu0 0
  %197 = vmatpush1.bf16.msra.mxu0 0
  %198 = vmatprep.subr.bf16.mxu0 0
  %199 = vmatpush1.bf16.msra.mxu0 0
  %200 = vmatprep.subr.bf16.mxu0 0
  %201 = vmatpush1.bf16.msra.mxu0 0
  %202 = vmatprep.subr.bf16.mxu0 0
  %203 = vmatpush1.bf16.msra.mxu0 0
  %204 = vmatprep.subr.bf16.mxu0 0
  %205 = vmatpush1.bf16.msra.mxu0 0
  %206 = vmatprep.subr.bf16.mxu0 0
  %207 = vmatpush1.bf16.msra.mxu0 0
  %208 = vmatprep.subr.bf16.mxu0 0
  %209 = vmatpush1.bf16.msra.mxu0 0
  %210 = vmatprep.subr.bf16.mxu0 0
  %211 = vmatpush1.bf16.msra.mxu0 0
  %212 = vmatprep.subr.bf16.mxu0 0
  %213 = vmatpush1.bf16.msra.mxu0 0
  %214 = vmatprep.subr.bf16.mxu0 0
  %215 = vmatpush1.bf16.msra.mxu0 0
  %216 = vmatprep.subr.bf16.mxu0 0
  %217 = vmatpush1.bf16.msra.mxu0 0
  %218 = vmatprep.subr.bf16.mxu0 0
  %219 = vmatpush1.bf16.msra.mxu0 0
  %220 = vmatprep.subr.bf16.mxu0 0
  %221 = vmatpush1.bf16.msra.mxu0 0
  %222 = vmatprep.subr.bf16.mxu0 0
  %223 = vmatpush1.bf16.msra.mxu0 0
  %224 = vmatprep.mubr.bf16.mxu0 0
  %225 = vmatmul.mubr.bf16.gmra.mrb[0].mxu0 %v187
  %v226 = vpop.f32.mrb[0].mxu0
  %v227 = vadd.f32 %v158, %v226
  %v228 = vpop.f32.mrb[0].mxu0
  %v229 = vpop.f32.mrb[0].mxu0
  %v230 = vadd.f32 %v163, %v229
  %v231 = vpop.f32.mrb[0].mxu0
  %232 = vmatprep.mubr.bf16.mxu0 0
  %233 = vmatmul.mubr.bf16.gmra.mrb[0].mxu0 %v190
  %v234 = vpop.f32.mrb[0].mxu0
  %v235 = vadd.f32 %v168, %v234
  %v236 = vpop.f32.mrb[0].mxu0
  %v237 = vpop.f32.mrb[0].mxu0
  %v238 = vadd.f32 %v173, %v237
  %v239 = vpop.f32.mrb[0].mxu0
  %240 = vdwg.mxu0
  %v241 = vmul.f32 %v227, 0.5
  %v242 = vmul.f32 %v230, 0.5
  %v243 = vmul.f32 %v235, 0.5
  %v244 = vmul.f32 %v238, 0.5
  %v245 = vtanh.pop %v241
  %v246 = vtanh.pop %v242
  %v247 = vtanh.pop %v243
  %v248 = vtanh.pop %v244
  %v249 = vmul.f32 %v245, 0.5
  %v250 = vmul.f32 %v246, 0.5
  %v251 = vmul.f32 %v247, 0.5
  %v252 = vmul.f32 %v248, 0.5
  %v253 = vadd.f32 %v249, 0.5
  %v254 = vadd.f32 %v250, 0.5
  %v255 = vadd.f32 %v251, 0.5
  %v256 = vadd.f32 %v252, 0.5
  %v257 = vld [vmem:[%s5] sm:$0xf]
  %v258 = vld [vmem:[%s6] sm:$0xff]
  %v259 = vpack.c.bf16 %v254, %v253
  %v260 = vpack.c.bf16 %v256, %v255
  %262 = vset.pattern.permute.xlu0 0
  %263 = vperm.xlu0 %262, %v258
  %v264 = vpop.permute.xlu0 %263
  %v267 = vsel %vm185, %v257, 0
  %269 = vmatprep.subr.bf16.mxu0 0
  %270 = vmatpush1.bf16.msra.mxu0 %v259
  %271 = vmatprep.subr.bf16.mxu0 0
  %272 = vmatpush1.bf16.msra.mxu0 %v260
  %273 = vmatprep.subr.bf16.mxu0 0
  %274 = vmatpush1.bf16.msra.mxu0 0
  %275 = vmatprep.subr.bf16.mxu0 0
  %276 = vmatpush1.bf16.msra.mxu0 0
  %277 = vmatprep.subr.bf16.mxu0 0
  %278 = vmatpush1.bf16.msra.mxu0 0
  %279 = vmatprep.subr.bf16.mxu0 0
  %280 = vmatpush1.bf16.msra.mxu0 0
  %281 = vmatprep.subr.bf16.mxu0 0
  %282 = vmatpush1.bf16.msra.mxu0 0
  %283 = vmatprep.subr.bf16.mxu0 0
  %284 = vmatpush1.bf16.msra.mxu0 0
  %285 = vmatprep.subr.bf16.mxu0 0
  %286 = vmatpush1.bf16.msra.mxu0 0
  %287 = vmatprep.subr.bf16.mxu0 0
  %288 = vmatpush1.bf16.msra.mxu0 0
  %289 = vmatprep.subr.bf16.mxu0 0
  %290 = vmatpush1.bf16.msra.mxu0 0
  %291 = vmatprep.subr.bf16.mxu0 0
  %292 = vmatpush1.bf16.msra.mxu0 0
  %293 = vmatprep.subr.bf16.mxu0 0
  %294 = vmatpush1.bf16.msra.mxu0 0
  %295 = vmatprep.subr.bf16.mxu0 0
  %296 = vmatpush1.bf16.msra.mxu0 0
  %297 = vmatprep.subr.bf16.mxu0 0
  %298 = vmatpush1.bf16.msra.mxu0 0
  %299 = vmatprep.subr.bf16.mxu0 0
  %300 = vmatpush1.bf16.msra.mxu0 0
  %301 = vmatprep.mubr.bf16.mxu0 0
  %302 = vmatmul.mubr.bf16.gmra.mrb[0].mxu0 %v267
  %v303 = vpop.f32.mrb[0].mxu0
  %v304 = vadd.f32 %v264, %v303
  %v305 = vpop.f32.mrb[0].mxu0
  %v306 = vpop.f32.mrb[0].mxu0
  %v307 = vpop.f32.mrb[0].mxu0
  %308 = vdwg.mxu0
  %v309 = vmul.f32 %v304, 0.5
  %v310 = vtanh.pop %v309
  %v311 = vmul.f32 %v310, 0.5
  %v312 = vadd.f32 %v311, 0.5
  %vm313 = vcmask 64512
  %314 = vst.msk [vmem:[%s7] sm:$0xff] %vm313, %v312
  // Predicated region
  $region30: #{net_forward.1} parent=0 // pred_check
    _
  $region31: #{net_forward.1} parent=0 // pred_check_branch
    %316 = sbr.rel (0) target = $region33
  $region32: #{net_forward.1} parent=0 // pred_region
    _
  $region33: #{net_forward.1} parent=0 // pred_fallthru
    _
  // Predicated region
  $region34: #{net_forward.1} parent=0 // pred_check
    _
  $region35: #{net_forward.1} parent=0 // pred_check_branch
    %318 = sbr.rel (0) target = $region37
  $region36: #{net_forward.1} parent=0 // pred_region
    _
  $region37: #{net_forward.1} parent=0 // pred_fallthru
    _

</llo_original>
